<compile_context>
chip_gen: v7x
topology: tpu7x:2x2x1
jax: 0.10.0
libtpu: 0.0.40
codegen_flags: <defaults>
</compile_context>

<pallas_src>
import jax
import jax.numpy as jnp
from jax import lax
from jax.experimental import pallas as pl
from jax.experimental.pallas import tpu as pltpu

NUM_NODE_FEATURES = 14
NUM_EDGE_FEATURES = 3
HIDDEN = 20
NUM_CLASSES = 2
NUM_LAYERS = 3
BN_EPS = 1e-5
NEG_SLOPE = 0.2           # GATConv default negative_slope
NEG_INF = -1e30

FP = 128                  # padded input-feature width (14 -> 128)
HP = 128                  # padded hidden width     (20 -> 128)
CP = 128                  # padded class width      ( 2 -> 128)


# ---------------------------------------------------------------------------
# Kernels
# ---------------------------------------------------------------------------
def feat_prep_kernel(x_ref, w_ref, att_src_ref, att_dst_ref,
                     hbf_ref, asrc_ref, adst_ref):
    """h = x @ W; emit bf16 h, asrc = att_src.h^T and adst = h.att_dst once."""
    h = jnp.dot(x_ref[...], w_ref[...], preferred_element_type=jnp.float32)
    hbf_ref[...] = h.astype(jnp.bfloat16)
    asrc_ref[...] = lax.dot_general(att_src_ref[...], h,           # [1, N]
                                    dimension_numbers=(((1,), (1,)), ((), ())),
                                    preferred_element_type=jnp.float32)
    adst_ref[...] = jnp.dot(h, att_dst_ref[...],                   # [N, 1]
                            preferred_element_type=jnp.float32)


def gat_attn_agg_kernel(cmb_ref, adst_ref, rv_ref, asrc_ref, hbf_ref,
                        bias_ref, z_ref):
    """One row tile of GATConv attention + aggregation (pre-BatchNorm).

    cmb_ref  : [TM, N]  f32  pre-folded att_edge.(edge_attr@W_edge) at edges,
                             NEG_INF at non-edges (edge j -> i)
    adst_ref : [TM, 1]  f32  precomputed att_dst . h_i  (destination term)
    rv_ref   : [TM, 1]  f32  1 iff node i has >= 1 incoming edge
    asrc_ref : [1, N]   f32  precomputed att_src . h_j  (source term, resident)
    hbf_ref  : [N, HP]  bf16 transformed features (resident across tiles)
    bias_ref : [1, HP]  f32
    z_ref    : [TM, HP] f32  pre-BN output rows for this tile
    """
    logits = adst_ref[...] + asrc_ref[...] + cmb_ref[...]           # [TM, N]
    logits = jnp.maximum(logits, NEG_SLOPE * logits)                # LeakyReLU(0.2)
    # non-edges carry ~-2e29 -> exp underflows to exactly 0; rows with no
    # incoming edges are zeroed via rv_ref (matches PyG: no aggregation).
    row_max = jnp.max(logits, axis=1, keepdims=True)
    p = jnp.exp(logits - row_max)
    denom = jnp.sum(p, axis=1, keepdims=True)                       # >= 1 always
    scale = pl.reciprocal(denom, approx=True) * rv_ref[...]
    alpha = (p * scale).astype(jnp.bfloat16)
    z = jnp.dot(alpha, hbf_ref[...], preferred_element_type=jnp.float32)
    z_ref[...] = z + bias_ref[...]


def bn_relu_prep_kernel(z_ref, nmask_ref, invn_ref, gamma_ref, beta_ref,
                        w_ref, att_src_ref, att_dst_ref,
                        hbf_ref, asrc_ref, adst_ref):
    """h = ReLU(BatchNorm_train(z)); emit next layer's bf16 h@W, asrc, adst.

    Padded node rows are excluded from the statistics via nmask / invn.
    """
    z = z_ref[...]
    nm = nmask_ref[...]                                   # [N, 1] 0/1 row mask
    zm = z * nm
    mu = jnp.sum(zm, axis=0, keepdims=True) * invn_ref[...]
    var = jnp.sum(zm * z, axis=0, keepdims=True) * invn_ref[...] - mu * mu
    scale = gamma_ref[...] * lax.rsqrt(var + BN_EPS)
    shift = beta_ref[...] - mu * scale
    h = jnp.maximum(z * scale + shift, 0.0)               # dropout(p=0) = id
    hl = jnp.dot(h, w_ref[...], preferred_element_type=jnp.float32)
    hbf_ref[...] = hl.astype(jnp.bfloat16)
    asrc_ref[...] = lax.dot_general(att_src_ref[...], hl,
                                    dimension_numbers=(((1,), (1,)), ((), ())),
                                    preferred_element_type=jnp.float32)
    adst_ref[...] = jnp.dot(hl, att_dst_ref[...],
                            preferred_element_type=jnp.float32)


def head_kernel(z_ref, nmask_ref, invn_ref, gamma_ref, beta_ref, pool_ref,
                fcw_ref, fcb_ref, node_ref, graph_ref, out_ref):
    """Last-layer BN + ReLU, global_add_pool and the final Linear."""
    z = z_ref[...]
    nm = nmask_ref[...]
    zm = z * nm
    mu = jnp.sum(zm, axis=0, keepdims=True) * invn_ref[...]
    var = jnp.sum(zm * z, axis=0, keepdims=True) * invn_ref[...] - mu * mu
    scale = gamma_ref[...] * lax.rsqrt(var + BN_EPS)
    shift = beta_ref[...] - mu * scale
    h = jnp.maximum(z * scale + shift, 0.0)
    node_ref[...] = h
    g = jnp.dot(pool_ref[...], h, preferred_element_type=jnp.float32)
    graph_ref[...] = g
    out_ref[...] = jnp.dot(g, fcw_ref[...],
                           preferred_element_type=jnp.float32) + fcb_ref[...]


# ---------------------------------------------------------------------------
# pallas_call wrappers
# ---------------------------------------------------------------------------
_VMEM = pl.BlockSpec(memory_space=pltpu.MemorySpace.VMEM)


def _feat_prep0(x_pad, lp):
    n_pad = x_pad.shape[0]
    return pl.pallas_call(
        feat_prep_kernel,
        out_shape=(jax.ShapeDtypeStruct((n_pad, HP), jnp.bfloat16),
                   jax.ShapeDtypeStruct((1, n_pad), jnp.float32),
                   jax.ShapeDtypeStruct((n_pad, 1), jnp.float32)),
        in_specs=[_VMEM] * 4,
        out_specs=(_VMEM, _VMEM, _VMEM),
    )(x_pad, lp["w"], lp["att_src"], lp["att_dst"])


def _gat_layer(cmb, adst, rowvalid, asrc, hbf, bias, *, tm, n_pad):
    cost = pl.CostEstimate(
        flops=int(2 * n_pad * n_pad * HP + 8 * n_pad * n_pad),
        transcendentals=int(n_pad * n_pad + n_pad),
        bytes_accessed=int(4 * n_pad * n_pad + 4 * n_pad + 2 * n_pad * HP
                           + 4 * n_pad * HP),
    )
    return pl.pallas_call(
        gat_attn_agg_kernel,
        out_shape=jax.ShapeDtypeStruct((n_pad, HP), jnp.float32),
        grid=(n_pad // tm,),
        in_specs=[
            pl.BlockSpec((tm, n_pad), lambda i: (i, 0)),      # pre-folded edge bias
            pl.BlockSpec((tm, 1), lambda i: (i, 0)),          # adst tile
            pl.BlockSpec((tm, 1), lambda i: (i, 0)),          # row-valid tile
            pl.BlockSpec((1, n_pad), lambda i: (0, 0)),       # asrc (resident)
            pl.BlockSpec((n_pad, HP), lambda i: (0, 0)),      # hbf  (resident)
            pl.BlockSpec((1, HP), lambda i: (0, 0)),          # bias
        ],
        out_specs=pl.BlockSpec((tm, HP), lambda i: (i, 0)),
        compiler_params=pltpu.CompilerParams(
            dimension_semantics=("parallel",),       # row tiles are independent
            vmem_limit_bytes=48 * 1024 * 1024),      # headroom on v7x (64 MiB phys)
        cost_estimate=cost,
    )(cmb, adst, rowvalid, asrc, hbf, bias)


def _bn_relu_prep(z, nodemask, inv_n, lp_cur, lp_next):
    n_pad = z.shape[0]
    return pl.pallas_call(
        bn_relu_prep_kernel,
        out_shape=(jax.ShapeDtypeStruct((n_pad, HP), jnp.bfloat16),
                   jax.ShapeDtypeStruct((1, n_pad), jnp.float32),
                   jax.ShapeDtypeStruct((n_pad, 1), jnp.float32)),
        in_specs=[_VMEM] * 8,
        out_specs=(_VMEM, _VMEM, _VMEM),
    )(z, nodemask, inv_n, lp_cur["bn_gamma"], lp_cur["bn_beta"],
      lp_next["w"], lp_next["att_src"], lp_next["att_dst"])


def _head(z, nodemask, inv_n, gamma, beta, pool, fcw, fcb):
    n_pad = z.shape[0]
    g = pool.shape[0]
    return pl.pallas_call(
        head_kernel,
        out_shape=(jax.ShapeDtypeStruct((n_pad, HP), jnp.float32),
                   jax.ShapeDtypeStruct((g, HP), jnp.float32),
                   jax.ShapeDtypeStruct((g, CP), jnp.float32)),
        in_specs=[_VMEM] * 8,
        out_specs=(_VMEM, _VMEM, _VMEM),
    )(z, nodemask, inv_n, gamma, beta, pool, fcw, fcb)


# ---------------------------------------------------------------------------
# Forward pass
# ---------------------------------------------------------------------------
def gat_mutagenicity_forward(x, edge_index, batch, edge_attr, params,
                             num_graphs=None):
    n = x.shape[0]
    if num_graphs is None:
        num_graphs = int(batch.max()) + 1  # host sync; prefer passing num_graphs

    src = edge_index[0]
    dst = edge_index[1]

    # row-tile size + padded node count (grid always even -> both v7x TCs busy)
    tm = 128 if n <= 1024 else 256
    n_pad = ((n + 2 * tm - 1) // (2 * tm)) * (2 * tm)

    layers = params["layers"]

    # ---- plain-JAX glue: densify the sparse graph -------------------------
    # Pre-fold the edge-attribute attention term per layer:
    #   cmb_l[i, j] = att_edge_l . (edge_attr_ij @ W_edge_l)  if edge j -> i
    #               = NEG_INF                                  otherwise
    # (one f32 [N,N] stream per layer instead of bf16 mask + f32 [3,N,N]).
    # TODO(synk): data-dependent scatter edge_index -> dense matrices has no
    # BlockSpec equivalent; the next big win for Mutagenicity-scale batches is
    # a per-graph block-diagonal grid via PrefetchScalarGridSpec node offsets,
    # shrinking the O(N^2) densification/attention to sum_g n_g^2.
    ea_f32 = edge_attr.astype(jnp.float32)
    base = jnp.full((n_pad, n_pad), NEG_INF, jnp.float32)
    cmbs = []
    for l in range(NUM_LAYERS):
        v = (layers[l]["lin_edge"] @ layers[l]["att_edge"])[:, 0]     # [3]
        eb = ea_f32 @ v                                               # [E]
        cmbs.append(base.at[dst, src].set(eb))   # assumes no duplicate edges

    rowvalid = jnp.zeros((n_pad,), jnp.float32).at[dst].set(1.0).reshape(n_pad, 1)
    nodemask = (jnp.arange(n_pad) < n).astype(jnp.float32).reshape(n_pad, 1)
    inv_n = jnp.full((1, 1), 1.0 / n, jnp.float32)
    batch_pad = jnp.concatenate(
        [batch.astype(jnp.int32), jnp.full((n_pad - n,), -1, jnp.int32)])
    pool = (batch_pad[None, :] ==
            jnp.arange(num_graphs, dtype=jnp.int32)[:, None]).astype(jnp.float32)
    x_pad = jnp.pad(x.astype(jnp.float32),
                    ((0, n_pad - n), (0, FP - NUM_NODE_FEATURES)))

    # ---- layers ------------------------------------------------------------
    hbf, asrc, adst = _feat_prep0(x_pad, layers[0])
    z = None
    for l in range(NUM_LAYERS):
        z = _gat_layer(cmbs[l], adst, rowvalid, asrc, hbf, layers[l]["bias"],
                       tm=tm, n_pad=n_pad)
        if l + 1 < NUM_LAYERS:
            hbf, asrc, adst = _bn_relu_prep(z, nodemask, inv_n,
                                            layers[l], layers[l + 1])

    node_p, graph_p, out_p = _head(z, nodemask, inv_n,
                                   layers[-1]["bn_gamma"], layers[-1]["bn_beta"],
                                   pool, params["fc_w"], params["fc_b"])
    # strip node/lane padding back to the module's true widths
    return (out_p[:, :NUM_CLASSES], node_p[:n, :HIDDEN], graph_p[:, :HIDDEN])


# ---------------------------------------------------------------------------
# Deterministic synthetic parameters (exact torch.manual_seed(7) values are not
# reproducible without torch; layout and semantics match the module).
# ---------------------------------------------------------------------------
def _pad2(a, rows, cols):
    return jnp.pad(a, ((0, rows - a.shape[0]), (0, cols - a.shape[1])))


def init_params(key):
    keys = jax.random.split(key, NUM_LAYERS + 2)
    in_dims = [NUM_NODE_FEATURES] + [HIDDEN] * (NUM_LAYERS - 1)
    in_pads = [FP] + [HP] * (NUM_LAYERS - 1)
    layers = []
    for l in range(NUM_LAYERS):
        k = jax.random.split(keys[l], 6)
        layers.append({
            "w": _pad2(0.2 * jax.random.normal(k[0], (in_dims[l], HIDDEN)),
                       in_pads[l], HP),
            "att_src": _pad2(0.2 * jax.random.normal(k[1], (1, HIDDEN)), 1, HP),
            "att_dst": _pad2(0.2 * jax.random.normal(k[2], (HIDDEN, 1)), HP, 1),
            "lin_edge": _pad2(0.2 * jax.random.normal(k[3], (NUM_EDGE_FEATURES, HIDDEN)),
                              NUM_EDGE_FEATURES, HP),
            "att_edge": _pad2(0.2 * jax.random.normal(k[4], (HIDDEN, 1)), HP, 1),
            "bias": _pad2(0.05 * jax.random.normal(k[5], (1, HIDDEN)), 1, HP),
            "bn_gamma": _pad2(jnp.ones((1, HIDDEN), jnp.float32), 1, HP),
            "bn_beta": jnp.zeros((1, HP), jnp.float32),
        })
    fc_w = 0.2 * jax.random.normal(keys[NUM_LAYERS], (HIDDEN, NUM_CLASSES))
    fc_b = 0.05 * jax.random.normal(keys[NUM_LAYERS + 1], (1, NUM_CLASSES))
    return {"layers": layers,
            "fc_w": _pad2(fc_w, HP, CP),
            "fc_b": _pad2(fc_b, 1, CP)}


if __name__ == "__main__":
    key = jax.random.PRNGKey(0)
    k_x, k_e, k_p = jax.random.split(key, 3)

    num_graphs = 2
    nodes_per_graph = 8
    n = num_graphs * nodes_per_graph

    x = jax.random.normal(k_x, (n, NUM_NODE_FEATURES), jnp.float32)
    batch = jnp.repeat(jnp.arange(num_graphs, dtype=jnp.int32), nodes_per_graph)

    # deterministic edges: a bidirectional ring inside each graph
    src_l, dst_l = [], []
    for g in range(num_graphs):
        base = g * nodes_per_graph
        for i in range(nodes_per_graph):
            j = (i + 1) % nodes_per_graph
            src_l += [base + i, base + j]
            dst_l += [base + j, base + i]
    edge_index = jnp.array([src_l, dst_l], dtype=jnp.int32)
    edge_attr = jax.random.normal(k_e, (edge_index.shape[1], NUM_EDGE_FEATURES),
                                  jnp.float32)

    params = init_params(k_p)

    out, node_embs, graph_emb = gat_mutagenicity_forward(
        x, edge_index, batch, edge_attr, params, num_graphs=num_graphs)
    jax.block_until_ready((out, node_embs, graph_emb))

    assert out.shape == (num_graphs, NUM_CLASSES)
    assert node_embs.shape == (n, HIDDEN)
    assert graph_emb.shape == (num_graphs, HIDDEN)
    assert bool(jnp.all(jnp.isfinite(out)))
    assert bool(jnp.all(jnp.isfinite(node_embs)))
    assert bool(jnp.all(jnp.isfinite(graph_emb)))
    print("KERNEL_OK")
</pallas_src>

<mosaic_0001>
module attributes {stable_mosaic.version = 11 : i64} {
  func.func @feat_prep_kernel(%arg0: memref<256x128xf32, #tpu.memory_space<vmem>>, %arg1: memref<128x128xf32, #tpu.memory_space<vmem>>, %arg2: memref<1x128xf32, #tpu.memory_space<vmem>>, %arg3: memref<128x1xf32, #tpu.memory_space<vmem>>, %arg4: memref<256x128xbf16, #tpu.memory_space<vmem>>, %arg5: memref<1x256xf32, #tpu.memory_space<vmem>>, %arg6: memref<256x1xf32, #tpu.memory_space<vmem>>) attributes {dimension_semantics = [], scalar_prefetch = 0 : i64, scratch_operands = 0 : i64, tpu.core_type = #tpu.core_type<tc>} {
    %c0 = arith.constant 0 : index
    %c0_0 = arith.constant 0 : index
    %0 = vector.load %arg0[%c0, %c0_0] : memref<256x128xf32, #tpu.memory_space<vmem>>, vector<256x128xf32>
    %c0_1 = arith.constant 0 : index
    %c0_2 = arith.constant 0 : index
    %1 = vector.load %arg1[%c0_1, %c0_2] : memref<128x128xf32, #tpu.memory_space<vmem>>, vector<128x128xf32>
    %cst = arith.constant dense<0.000000e+00> : vector<256x128xf32>
    %2 = tpu.matmul %0, %1, %cst {dimension_numbers = #tpu.dot_dimension_numbers<[1], [0], [0], [1], [0, 0, 1, 1], [], []>} : vector<256x128xf32>, vector<128x128xf32>, vector<256x128xf32> -> vector<256x128xf32>
    %3 = arith.truncf %2 : vector<256x128xf32> to vector<256x128xbf16>
    %c0_3 = arith.constant 0 : index
    %c0_4 = arith.constant 0 : index
    %4 = vector.load %arg4[%c0_3, %c0_4] : memref<256x128xbf16, #tpu.memory_space<vmem>>, vector<256x128xbf16>
    tpu.vector_store %arg4[%c0_3, %c0_4], %3 {strides = array<i32>} : memref<256x128xbf16, #tpu.memory_space<vmem>>, vector<256x128xbf16>,
    %c0_5 = arith.constant 0 : index
    %c0_6 = arith.constant 0 : index
    %5 = vector.load %arg2[%c0_5, %c0_6] : memref<1x128xf32, #tpu.memory_space<vmem>>, vector<1x128xf32>
    %cst_7 = arith.constant dense<0.000000e+00> : vector<1x256xf32>
    %6 = tpu.matmul %5, %2, %cst_7 {dimension_numbers = #tpu.dot_dimension_numbers<[1], [1], [0], [0], [0, 0, 1, 0], [], []>} : vector<1x128xf32>, vector<256x128xf32>, vector<1x256xf32> -> vector<1x256xf32>
    %c0_8 = arith.constant 0 : index
    %c0_9 = arith.constant 0 : index
    %7 = vector.load %arg5[%c0_8, %c0_9] : memref<1x256xf32, #tpu.memory_space<vmem>>, vector<1x256xf32>
    tpu.vector_store %arg5[%c0_8, %c0_9], %6 {strides = array<i32>} : memref<1x256xf32, #tpu.memory_space<vmem>>, vector<1x256xf32>,
    %c0_10 = arith.constant 0 : index
    %c0_11 = arith.constant 0 : index
    %8 = vector.load %arg3[%c0_10, %c0_11] : memref<128x1xf32, #tpu.memory_space<vmem>>, vector<128x1xf32>
    %cst_12 = arith.constant dense<0.000000e+00> : vector<256x1xf32>
    %9 = tpu.matmul %2, %8, %cst_12 {dimension_numbers = #tpu.dot_dimension_numbers<[1], [0], [0], [1], [0, 0, 1, 1], [], []>} : vector<256x128xf32>, vector<128x1xf32>, vector<256x1xf32> -> vector<256x1xf32>
    %c0_13 = arith.constant 0 : index
    %c0_14 = arith.constant 0 : index
    %10 = vector.load %arg6[%c0_13, %c0_14] : memref<256x1xf32, #tpu.memory_space<vmem>>, vector<256x1xf32>
    tpu.vector_store %arg6[%c0_13, %c0_14], %9 {strides = array<i32>} : memref<256x1xf32, #tpu.memory_space<vmem>>, vector<256x1xf32>,
    return
  }
}

</mosaic_0001>

<llo_original>
// kernel: tpu_custom_call.1
$region0: #{tpu_custom_call.1}
  #allocation0 [shape = 'u32[]', space=smem, size = 0x4, offset = 0x4, fixed_abs, tag = 'smem constant byte address 0x4 - core index']
  #allocation1 [shape = 'u32[144,128]{1,0:T(1,128)}', space=vmem, size = 0x12000, scoped, tag = 'internal scratch']
  %s0 = inlined_call_operand.hbm [shape: f32[256,128], index: 0, kind: input, shape index: {}]
  %s1 = inlined_call_operand.vmem [shape: f32[128,128], index: 1, kind: input, shape index: {}]
  %s2 = inlined_call_operand.vmem [shape: f32[1,128], index: 2, kind: input, shape index: {}]
  %s3 = inlined_call_operand.vmem [shape: f32[128,1], index: 3, kind: input, shape index: {}]
  %s4 = inlined_call_operand.hbm [shape: bf16[256,128], index: 4, kind: output, shape index: {0}]
  %s5 = inlined_call_operand.hbm [shape: f32[1,256], index: 5, kind: output, shape index: {1}]
  %s6 = inlined_call_operand.vmem [shape: f32[256,1], index: 6, kind: output, shape index: {2}]
  %7 = xla_tuple %s4, %s5, %s6
  %s8 = sld [smem:[#allocation0]]
  $region46: #{tpu_custom_call.1} parent=0
    _
  %s10 = ssub.s32 1, %s8
  %s11 = scalar_select 0, %s10, %s8
  $region1: #{tpu_custom_call.1} parent=0
    #allocation2 [shape = 'u8[131072]{0}', space=vmem, size = 0x20000, scoped, tag = 'input window, operand 0, single buffered']
    #allocation3 [shape = 's32[1]{0}', space=sflag, size = 0x4, scoped, tag = 'scoped memory for tpu_custom_call.1']
    #allocation4 [shape = 's32[1]{0}', space=sflag, size = 0x4, scoped, tag = 'scoped memory for tpu_custom_call.1']
    #allocation5 [shape = 'u8[65536]{0}', space=vmem, size = 0x10000, scoped, tag = 'output window, operand 0, single buffered']
    #allocation6 [shape = 'u8[1024]{0}', space=vmem, size = 0x400, scoped, tag = 'output window, operand 1, single buffered']
    #allocation7 [shape = 's32[1]{0}', space=sflag, size = 0x4, scoped, tag = 'scoped memory for tpu_custom_call.1']
    %12 = vsyncpa [#allocation3], 0
    %13 = vsyncpa [#allocation4], 0
    %14 = vsyncpa [#allocation7], 0
    // Predicated region
    $region2: #{tpu_custom_call.1} parent=1 // pred_check
      _
    $region3: #{tpu_custom_call.1} parent=1 // pred_check_branch
      %16 = sbr.rel (0) target = $region5
    $region4: #{tpu_custom_call.1} parent=1 // pred_region
      %s18 = ssub.s32 4096, 4096
      %19 = vsyncadd [#allocation3], %s18
      %s20 = sshll.u32 [#allocation2], 4
      %s21 = int_to_ptr.vmem [resolvable:$true] %s20
      %26 = dma.hbm_to_vmem [thread:$0]  %s0, 4096, %s21, [#allocation3], 128, 128, 8
    $region5: #{tpu_custom_call.1} parent=1 // pred_fallthru
      _
    // Predicated region
    $region6: #{tpu_custom_call.1} parent=1 // pred_check
      _
    $region7: #{tpu_custom_call.1} parent=1 // pred_check_branch
      %28 = sbr.rel (0) target = $region9
    $region8: #{tpu_custom_call.1} parent=1 // pred_region
      _
    $region9: #{tpu_custom_call.1} parent=1 // pred_fallthru
      _
    // Predicated region
    $region10: #{tpu_custom_call.1} parent=1 // pred_check
      _
    $region11: #{tpu_custom_call.1} parent=1 // pred_check_branch
      %30 = sbr.rel (0) target = $region13
    $region12: #{tpu_custom_call.1} parent=1 // pred_region
      _
    $region13: #{tpu_custom_call.1} parent=1 // pred_fallthru
      _
    // Predicated region
    $region14: #{tpu_custom_call.1} parent=1 // pred_check
      _
    $region15: #{tpu_custom_call.1} parent=1 // pred_check_branch
      %32 = sbr.rel (0) target = $region17
    $region16: #{tpu_custom_call.1} parent=1 // pred_region
      _
    $region17: #{tpu_custom_call.1} parent=1 // pred_fallthru
      _
    // Predicated region
    $region18: #{tpu_custom_call.1} parent=1 // pred_check
      _
    $region19: #{tpu_custom_call.1} parent=1 // pred_check_branch
      %34 = sbr.rel (0) target = $region21
    $region20: #{tpu_custom_call.1} parent=1 // pred_region
      %35 = dma.done [#allocation3], 4096
    $region21: #{tpu_custom_call.1} parent=1 // pred_fallthru
      _
    %v36 = vld [vmem:[#allocation2] sm:$0xff]
    %v37 = vld [vmem:[#allocation2 + $0x8] sm:$0xff]
    %v38 = vld [vmem:[#allocation2 + $0x10] sm:$0xff]
    %v39 = vld [vmem:[#allocation2 + $0x18] sm:$0xff]
    %v40 = vld [vmem:[#allocation2 + $0x20] sm:$0xff]
    %v41 = vld [vmem:[#allocation2 + $0x28] sm:$0xff]
    %v42 = vld [vmem:[#allocation2 + $0x30] sm:$0xff]
    %v43 = vld [vmem:[#allocation2 + $0x38] sm:$0xff]
    %v44 = vld [vmem:[#allocation2 + $0x40] sm:$0xff]
    %v45 = vld [vmem:[#allocation2 + $0x48] sm:$0xff]
    %v46 = vld [vmem:[#allocation2 + $0x50] sm:$0xff]
    %v47 = vld [vmem:[#allocation2 + $0x58] sm:$0xff]
    %v48 = vld [vmem:[#allocation2 + $0x60] sm:$0xff]
    %v49 = vld [vmem:[#allocation2 + $0x68] sm:$0xff]
    %v50 = vld [vmem:[#allocation2 + $0x70] sm:$0xff]
    %v51 = vld [vmem:[#allocation2 + $0x78] sm:$0xff]
    %v52 = vld [vmem:[#allocation2 + $0x80] sm:$0xff]
    %v53 = vld [vmem:[#allocation2 + $0x88] sm:$0xff]
    %v54 = vld [vmem:[#allocation2 + $0x90] sm:$0xff]
    %v55 = vld [vmem:[#allocation2 + $0x98] sm:$0xff]
    %v56 = vld [vmem:[#allocation2 + $0xa0] sm:$0xff]
    %v57 = vld [vmem:[#allocation2 + $0xa8] sm:$0xff]
    %v58 = vld [vmem:[#allocation2 + $0xb0] sm:$0xff]
    %v59 = vld [vmem:[#allocation2 + $0xb8] sm:$0xff]
    %v60 = vld [vmem:[#allocation2 + $0xc0] sm:$0xff]
    %v61 = vld [vmem:[#allocation2 + $0xc8] sm:$0xff]
    %v62 = vld [vmem:[#allocation2 + $0xd0] sm:$0xff]
    %v63 = vld [vmem:[#allocation2 + $0xd8] sm:$0xff]
    %v64 = vld [vmem:[#allocation2 + $0xe0] sm:$0xff]
    %v65 = vld [vmem:[#allocation2 + $0xe8] sm:$0xff]
    %v66 = vld [vmem:[#allocation2 + $0xf0] sm:$0xff]
    %v67 = vld [vmem:[#allocation2 + $0xf8] sm:$0xff]
    %v68 = vld [vmem:[%s1] sm:$0xff]
    %v69 = vld [vmem:[%s1 + $0x8] sm:$0xff]
    %v70 = vld [vmem:[%s1 + $0x10] sm:$0xff]
    %v71 = vld [vmem:[%s1 + $0x18] sm:$0xff]
    %v72 = vld [vmem:[%s1 + $0x20] sm:$0xff]
    %v73 = vld [vmem:[%s1 + $0x28] sm:$0xff]
    %v74 = vld [vmem:[%s1 + $0x30] sm:$0xff]
    %v75 = vld [vmem:[%s1 + $0x38] sm:$0xff]
    %v76 = vld [vmem:[%s1 + $0x40] sm:$0xff]
    %v77 = vld [vmem:[%s1 + $0x48] sm:$0xff]
    %v78 = vld [vmem:[%s1 + $0x50] sm:$0xff]
    %v79 = vld [vmem:[%s1 + $0x58] sm:$0xff]
    %v80 = vld [vmem:[%s1 + $0x60] sm:$0xff]
    %v81 = vld [vmem:[%s1 + $0x68] sm:$0xff]
    %v82 = vld [vmem:[%s1 + $0x70] sm:$0xff]
    %v83 = vld [vmem:[%s1 + $0x78] sm:$0xff]
    %84 = vmatprep.subr.mxu0 0.0
    %85 = vmatpush1.msra.mxu0 %v68
    %86 = vmatprep.subr.mxu0 0.0
    %87 = vmatpush1.msra.mxu0 %v69
    %88 = vmatprep.subr.mxu0 0.0
    %89 = vmatpush1.msra.mxu0 %v70
    %90 = vmatprep.subr.mxu0 0.0
    %91 = vmatpush1.msra.mxu0 %v71
    %92 = vmatprep.subr.mxu0 0.0
    %93 = vmatpush1.msra.mxu0 %v72
    %94 = vmatprep.subr.mxu0 0.0
    %95 = vmatpush1.msra.mxu0 %v73
    %96 = vmatprep.subr.mxu0 0.0
    %97 = vmatpush1.msra.mxu0 %v74
    %98 = vmatprep.subr.mxu0 0.0
    %99 = vmatpush1.msra.mxu0 %v75
    %100 = vmatprep.subr.mxu0 0.0
    %101 = vmatpush1.msra.mxu0 %v76
    %102 = vmatprep.subr.mxu0 0.0
    %103 = vmatpush1.msra.mxu0 %v77
    %104 = vmatprep.subr.mxu0 0.0
    %105 = vmatpush1.msra.mxu0 %v78
    %106 = vmatprep.subr.mxu0 0.0
    %107 = vmatpush1.msra.mxu0 %v79
    %108 = vmatprep.subr.mxu0 0.0
    %109 = vmatpush1.msra.mxu0 %v80
    %110 = vmatprep.subr.mxu0 0.0
    %111 = vmatpush1.msra.mxu0 %v81
    %112 = vmatprep.subr.mxu0 0.0
    %113 = vmatpush1.msra.mxu0 %v82
    %114 = vmatprep.subr.mxu0 0.0
    %115 = vmatpush1.msra.mxu0 %v83
    %116 = vmatprep.subr.mxu0 0.0
    %117 = vmatpush1.msra.mxu0 0.0
    %118 = vmatprep.subr.mxu0 0.0
    %119 = vmatpush1.msra.mxu0 0.0
    %120 = vmatprep.subr.mxu0 0.0
    %121 = vmatpush1.msra.mxu0 0.0
    %122 = vmatprep.subr.mxu0 0.0
    %123 = vmatpush1.msra.mxu0 0.0
    %124 = vmatprep.subr.mxu0 0.0
    %125 = vmatpush1.msra.mxu0 0.0
    %126 = vmatprep.subr.mxu0 0.0
    %127 = vmatpush1.msra.mxu0 0.0
    %128 = vmatprep.subr.mxu0 0.0
    %129 = vmatpush1.msra.mxu0 0.0
    %130 = vmatprep.subr.mxu0 0.0
    %131 = vmatpush1.msra.mxu0 0.0
    %132 = vmatprep.subr.mxu0 0.0
    %133 = vmatpush1.msra.mxu0 0.0
    %134 = vmatprep.subr.mxu0 0.0
    %135 = vmatpush1.msra.mxu0 0.0
    %136 = vmatprep.subr.mxu0 0.0
    %137 = vmatpush1.msra.mxu0 0.0
    %138 = vmatprep.subr.mxu0 0.0
    %139 = vmatpush1.msra.mxu0 0.0
    %140 = vmatprep.subr.mxu0 0.0
    %141 = vmatpush1.msra.mxu0 0.0
    %142 = vmatprep.subr.mxu0 0.0
    %143 = vmatpush1.msra.mxu0 0.0
    %144 = vmatprep.subr.mxu0 0.0
    %145 = vmatpush1.msra.mxu0 0.0
    %146 = vmatprep.subr.mxu0 0.0
    %147 = vmatpush1.msra.mxu0 0.0
    %148 = vmatprep.mubr.f32.mxu0 0.0
    %149 = vmatmul.mubr.f32.gmra.mrb[0].mxu0 %v36
    %v150 = vpop.f32.mrb[0].mxu0
    %v151 = vadd.f32 0.0, %v150
    %v152 = vpop.f32.mrb[0].mxu0
    %153 = vmatprep.mubr.f32.mxu0 0.0
    %154 = vmatmul.mubr.f32.gmra.mrb[0].mxu0 %v37
    %v155 = vpop.f32.mrb[0].mxu0
    %v156 = vadd.f32 0.0, %v155
    %v157 = vpop.f32.mrb[0].mxu0
    %158 = vmatprep.mubr.f32.mxu0 0.0
    %159 = vmatmul.mubr.f32.gmra.mrb[0].mxu0 %v38
    %v160 = vpop.f32.mrb[0].mxu0
    %v161 = vadd.f32 0.0, %v160
    %v162 = vpop.f32.mrb[0].mxu0
    %163 = vmatprep.mubr.f32.mxu0 0.0
    %164 = vmatmul.mubr.f32.gmra.mrb[0].mxu0 %v39
    %v165 = vpop.f32.mrb[0].mxu0
    %v166 = vadd.f32 0.0, %v165
    %v167 = vpop.f32.mrb[0].mxu0
    %168 = vmatprep.mubr.f32.mxu0 0.0
    %169 = vmatmul.mubr.f32.gmra.mrb[0].mxu0 %v40
    %v170 = vpop.f32.mrb[0].mxu0
    %v171 = vadd.f32 0.0, %v170
    %v172 = vpop.f32.mrb[0].mxu0
    %173 = vmatprep.mubr.f32.mxu0 0.0
    %174 = vmatmul.mubr.f32.gmra.mrb[0].mxu0 %v41
    %v175 = vpop.f32.mrb[0].mxu0
    %v176 = vadd.f32 0.0, %v175
    %v177 = vpop.f32.mrb[0].mxu0
    %178 = vmatprep.mubr.f32.mxu0 0.0
    %179 = vmatmul.mubr.f32.gmra.mrb[0].mxu0 %v42
    %v180 = vpop.f32.mrb[0].mxu0
    %v181 = vadd.f32 0.0, %v180
    %v182 = vpop.f32.mrb[0].mxu0
    %183 = vmatprep.mubr.f32.mxu0 0.0
    %184 = vmatmul.mubr.f32.gmra.mrb[0].mxu0 %v43
    %v185 = vpop.f32.mrb[0].mxu0
    %v186 = vadd.f32 0.0, %v185
    %v187 = vpop.f32.mrb[0].mxu0
    %188 = vmatprep.mubr.f32.mxu0 0.0
    %189 = vmatmul.mubr.f32.gmra.mrb[0].mxu0 %v44
    %v190 = vpop.f32.mrb[0].mxu0
    %v191 = vadd.f32 0.0, %v190
    %v192 = vpop.f32.mrb[0].mxu0
    %193 = vmatprep.mubr.f32.mxu0 0.0
    %194 = vmatmul.mubr.f32.gmra.mrb[0].mxu0 %v45
    %v195 = vpop.f32.mrb[0].mxu0
    %v196 = vadd.f32 0.0, %v195
    %v197 = vpop.f32.mrb[0].mxu0
    %198 = vmatprep.mubr.f32.mxu0 0.0
    %199 = vmatmul.mubr.f32.gmra.mrb[0].mxu0 %v46
    %v200 = vpop.f32.mrb[0].mxu0
    %v201 = vadd.f32 0.0, %v200
    %v202 = vpop.f32.mrb[0].mxu0
    %203 = vmatprep.mubr.f32.mxu0 0.0
    %204 = vmatmul.mubr.f32.gmra.mrb[0].mxu0 %v47
    %v205 = vpop.f32.mrb[0].mxu0
    %v206 = vadd.f32 0.0, %v205
    %v207 = vpop.f32.mrb[0].mxu0
    %208 = vmatprep.mubr.f32.mxu0 0.0
    %209 = vmatmul.mubr.f32.gmra.mrb[0].mxu0 %v48
    %v210 = vpop.f32.mrb[0].mxu0
    %v211 = vadd.f32 0.0, %v210
    %v212 = vpop.f32.mrb[0].mxu0
    %213 = vmatprep.mubr.f32.mxu0 0.0
    %214 = vmatmul.mubr.f32.gmra.mrb[0].mxu0 %v49
    %v215 = vpop.f32.mrb[0].mxu0
    %v216 = vadd.f32 0.0, %v215
    %v217 = vpop.f32.mrb[0].mxu0
    %218 = vmatprep.mubr.f32.mxu0 0.0
    %219 = vmatmul.mubr.f32.gmra.mrb[0].mxu0 %v50
    %v220 = vpop.f32.mrb[0].mxu0
    %v221 = vadd.f32 0.0, %v220
    %v222 = vpop.f32.mrb[0].mxu0
    %223 = vmatprep.mubr.f32.mxu0 0.0
    %224 = vmatmul.mubr.f32.gmra.mrb[0].mxu0 %v51
    %v225 = vpop.f32.mrb[0].mxu0
    %v226 = vadd.f32 0.0, %v225
    %v227 = vpop.f32.mrb[0].mxu0
    %228 = vmatprep.mubr.f32.mxu0 0.0
    %229 = vmatmul.mubr.f32.gmra.mrb[0].mxu0 %v52
    %v230 = vpop.f32.mrb[0].mxu0
    %v231 = vadd.f32 0.0, %v230
    %v232 = vpop.f32.mrb[0].mxu0
    %233 = vmatprep.mubr.f32.mxu0 0.0
    %234 = vmatmul.mubr.f32.gmra.mrb[0].mxu0 %v53
    %v235 = vpop.f32.mrb[0].mxu0
    %v236 = vadd.f32 0.0, %v235
    %v237 = vpop.f32.mrb[0].mxu0
    %238 = vmatprep.mubr.f32.mxu0 0.0
    %239 = vmatmul.mubr.f32.gmra.mrb[0].mxu0 %v54
    %v240 = vpop.f32.mrb[0].mxu0
    %v241 = vadd.f32 0.0, %v240
    %v242 = vpop.f32.mrb[0].mxu0
    %243 = vmatprep.mubr.f32.mxu0 0.0
    %244 = vmatmul.mubr.f32.gmra.mrb[0].mxu0 %v55
    %v245 = vpop.f32.mrb[0].mxu0
    %v246 = vadd.f32 0.0, %v245
    %v247 = vpop.f32.mrb[0].mxu0
    %248 = vmatprep.mubr.f32.mxu0 0.0
    %249 = vmatmul.mubr.f32.gmra.mrb[0].mxu0 %v56
    %v250 = vpop.f32.mrb[0].mxu0
    %v251 = vadd.f32 0.0, %v250
    %v252 = vpop.f32.mrb[0].mxu0
    %253 = vmatprep.mubr.f32.mxu0 0.0
    %254 = vmatmul.mubr.f32.gmra.mrb[0].mxu0 %v57
    %v255 = vpop.f32.mrb[0].mxu0
    %v256 = vadd.f32 0.0, %v255
    %v257 = vpop.f32.mrb[0].mxu0
    %258 = vmatprep.mubr.f32.mxu0 0.0
    %259 = vmatmul.mubr.f32.gmra.mrb[0].mxu0 %v58
    %v260 = vpop.f32.mrb[0].mxu0
    %v261 = vadd.f32 0.0, %v260
    %v262 = vpop.f32.mrb[0].mxu0
    %263 = vmatprep.mubr.f32.mxu0 0.0
    %264 = vmatmul.mubr.f32.gmra.mrb[0].mxu0 %v59
    %v265 = vpop.f32.mrb[0].mxu0
    %v266 = vadd.f32 0.0, %v265
    %v267 = vpop.f32.mrb[0].mxu0
    %268 = vmatprep.mubr.f32.mxu0 0.0
    %269 = vmatmul.mubr.f32.gmra.mrb[0].mxu0 %v60
    %v270 = vpop.f32.mrb[0].mxu0
    %v271 = vadd.f32 0.0, %v270
    %v272 = vpop.f32.mrb[0].mxu0
    %273 = vmatprep.mubr.f32.mxu0 0.0
    %274 = vmatmul.mubr.f32.gmra.mrb[0].mxu0 %v61
    %v275 = vpop.f32.mrb[0].mxu0
    %v276 = vadd.f32 0.0, %v275
    %v277 = vpop.f32.mrb[0].mxu0
    %278 = vmatprep.mubr.f32.mxu0 0.0
    %279 = vmatmul.mubr.f32.gmra.mrb[0].mxu0 %v62
    %v280 = vpop.f32.mrb[0].mxu0
    %v281 = vadd.f32 0.0, %v280
    %v282 = vpop.f32.mrb[0].mxu0
    %283 = vmatprep.mubr.f32.mxu0 0.0
    %284 = vmatmul.mubr.f32.gmra.mrb[0].mxu0 %v63
    %v285 = vpop.f32.mrb[0].mxu0
    %v286 = vadd.f32 0.0, %v285
    %v287 = vpop.f32.mrb[0].mxu0
    %288 = vmatprep.mubr.f32.mxu0 0.0
    %289 = vmatmul.mubr.f32.gmra.mrb[0].mxu0 %v64
    %v290 = vpop.f32.mrb[0].mxu0
    %v291 = vadd.f32 0.0, %v290
    %v292 = vpop.f32.mrb[0].mxu0
    %293 = vmatprep.mubr.f32.mxu0 0.0
    %294 = vmatmul.mubr.f32.gmra.mrb[0].mxu0 %v65
    %v295 = vpop.f32.mrb[0].mxu0
    %v296 = vadd.f32 0.0, %v295
    %v297 = vpop.f32.mrb[0].mxu0
    %298 = vmatprep.mubr.f32.mxu0 0.0
    %299 = vmatmul.mubr.f32.gmra.mrb[0].mxu0 %v66
    %v300 = vpop.f32.mrb[0].mxu0
    %v301 = vadd.f32 0.0, %v300
    %v302 = vpop.f32.mrb[0].mxu0
    %303 = vmatprep.mubr.f32.mxu0 0.0
    %304 = vmatmul.mubr.f32.gmra.mrb[0].mxu0 %v67
    %v305 = vpop.f32.mrb[0].mxu0
    %v306 = vadd.f32 0.0, %v305
    %v307 = vpop.f32.mrb[0].mxu0
    %308 = vdwg.mxu0
    %v309 = vpack.c.bf16 %v156, %v151
    %v310 = vpack.c.bf16 %v166, %v161
    %v311 = vpack.c.bf16 %v176, %v171
    %v312 = vpack.c.bf16 %v186, %v181
    %v313 = vpack.c.bf16 %v196, %v191
    %v314 = vpack.c.bf16 %v206, %v201
    %v315 = vpack.c.bf16 %v216, %v211
    %v316 = vpack.c.bf16 %v226, %v221
    %v317 = vpack.c.bf16 %v236, %v231
    %v318 = vpack.c.bf16 %v246, %v241
    %v319 = vpack.c.bf16 %v256, %v251
    %v320 = vpack.c.bf16 %v266, %v261
    %v321 = vpack.c.bf16 %v276, %v271
    %v322 = vpack.c.bf16 %v286, %v281
    %v323 = vpack.c.bf16 %v296, %v291
    %v324 = vpack.c.bf16 %v306, %v301
    %v341 = vunpack.c.l.b16 %v309
    %v342 = vunpack.c.h.b16 %v309
    %v343 = vunpack.c.l.b16 %v310
    %v344 = vunpack.c.h.b16 %v310
    %v345 = vunpack.c.l.b16 %v311
    %v346 = vunpack.c.h.b16 %v311
    %v347 = vunpack.c.l.b16 %v312
    %v348 = vunpack.c.h.b16 %v312
    %v349 = vunpack.c.l.b16 %v313
    %v350 = vunpack.c.h.b16 %v313
    %v351 = vunpack.c.l.b16 %v314
    %v352 = vunpack.c.h.b16 %v314
    %v353 = vunpack.c.l.b16 %v315
    %v354 = vunpack.c.h.b16 %v315
    %v355 = vunpack.c.l.b16 %v316
    %v356 = vunpack.c.h.b16 %v316
    %v357 = vunpack.c.l.b16 %v317
    %v358 = vunpack.c.h.b16 %v317
    %v359 = vunpack.c.l.b16 %v318
    %v360 = vunpack.c.h.b16 %v318
    %v361 = vunpack.c.l.b16 %v319
    %v362 = vunpack.c.h.b16 %v319
    %v363 = vunpack.c.l.b16 %v320
    %v364 = vunpack.c.h.b16 %v320
    %v365 = vunpack.c.l.b16 %v321
    %v366 = vunpack.c.h.b16 %v321
    %v367 = vunpack.c.l.b16 %v322
    %v368 = vunpack.c.h.b16 %v322
    %v369 = vunpack.c.l.b16 %v323
    %v370 = vunpack.c.h.b16 %v323
    %v371 = vunpack.c.l.b16 %v324
    %v372 = vunpack.c.h.b16 %v324
    %v373 = vpack.c.b16 %v341, %v341
    %v374 = vpack.c.b16 %v342, %v342
    %v375 = vpack.c.b16 %v343, %v343
    %v376 = vpack.c.b16 %v344, %v344
    %v377 = vpack.c.b16 %v345, %v345
    %v378 = vpack.c.b16 %v346, %v346
    %v379 = vpack.c.b16 %v347, %v347
    %v380 = vpack.c.b16 %v348, %v348
    %v381 = vpack.c.b16 %v349, %v349
    %v382 = vpack.c.b16 %v350, %v350
    %v383 = vpack.c.b16 %v351, %v351
    %v384 = vpack.c.b16 %v352, %v352
    %v385 = vpack.c.b16 %v353, %v353
    %v386 = vpack.c.b16 %v354, %v354
    %v387 = vpack.c.b16 %v355, %v355
    %v388 = vpack.c.b16 %v356, %v356
    %v389 = vpack.c.b16 %v357, %v357
    %v390 = vpack.c.b16 %v358, %v358
    %v391 = vpack.c.b16 %v359, %v359
    %v392 = vpack.c.b16 %v360, %v360
    %v393 = vpack.c.b16 %v361, %v361
    %v394 = vpack.c.b16 %v362, %v362
    %v395 = vpack.c.b16 %v363, %v363
    %v396 = vpack.c.b16 %v364, %v364
    %v397 = vpack.c.b16 %v365, %v365
    %v398 = vpack.c.b16 %v366, %v366
    %v399 = vpack.c.b16 %v367, %v367
    %v400 = vpack.c.b16 %v368, %v368
    %v401 = vpack.c.b16 %v369, %v369
    %v402 = vpack.c.b16 %v370, %v370
    %v403 = vpack.c.b16 %v371, %v371
    %v404 = vpack.c.b16 %v372, %v372
    %437 = vst [vmem:[#allocation5] sm:$0xf] %v373
    %438 = vst [vmem:[#allocation5 + $0x4] sm:$0xf] %v374
    %439 = vst [vmem:[#allocation5 + $0x8] sm:$0xf] %v375
    %440 = vst [vmem:[#allocation5 + $0xc] sm:$0xf] %v376
    %441 = vst [vmem:[#allocation5 + $0x10] sm:$0xf] %v377
    %442 = vst [vmem:[#allocation5 + $0x14] sm:$0xf] %v378
    %443 = vst [vmem:[#allocation5 + $0x18] sm:$0xf] %v379
    %444 = vst [vmem:[#allocation5 + $0x1c] sm:$0xf] %v380
    %445 = vst [vmem:[#allocation5 + $0x20] sm:$0xf] %v381
    %446 = vst [vmem:[#allocation5 + $0x24] sm:$0xf] %v382
    %447 = vst [vmem:[#allocation5 + $0x28] sm:$0xf] %v383
    %448 = vst [vmem:[#allocation5 + $0x2c] sm:$0xf] %v384
    %449 = vst [vmem:[#allocation5 + $0x30] sm:$0xf] %v385
    %450 = vst [vmem:[#allocation5 + $0x34] sm:$0xf] %v386
    %451 = vst [vmem:[#allocation5 + $0x38] sm:$0xf] %v387
    %452 = vst [vmem:[#allocation5 + $0x3c] sm:$0xf] %v388
    %453 = vst [vmem:[#allocation5 + $0x40] sm:$0xf] %v389
    %454 = vst [vmem:[#allocation5 + $0x44] sm:$0xf] %v390
    %455 = vst [vmem:[#allocation5 + $0x48] sm:$0xf] %v391
    %456 = vst [vmem:[#allocation5 + $0x4c] sm:$0xf] %v392
    %457 = vst [vmem:[#allocation5 + $0x50] sm:$0xf] %v393
    %458 = vst [vmem:[#allocation5 + $0x54] sm:$0xf] %v394
    %459 = vst [vmem:[#allocation5 + $0x58] sm:$0xf] %v395
    %460 = vst [vmem:[#allocation5 + $0x5c] sm:$0xf] %v396
    %461 = vst [vmem:[#allocation5 + $0x60] sm:$0xf] %v397
    %462 = vst [vmem:[#allocation5 + $0x64] sm:$0xf] %v398
    %463 = vst [vmem:[#allocation5 + $0x68] sm:$0xf] %v399
    %464 = vst [vmem:[#allocation5 + $0x6c] sm:$0xf] %v400
    %465 = vst [vmem:[#allocation5 + $0x70] sm:$0xf] %v401
    %466 = vst [vmem:[#allocation5 + $0x74] sm:$0xf] %v402
    %467 = vst [vmem:[#allocation5 + $0x78] sm:$0xf] %v403
    %468 = vst [vmem:[#allocation5 + $0x7c] sm:$0xf] %v404
    %v469 = vld [vmem:[%s2] sm:$0x1]
    %470 = vmatprep.subr.mxu0 0.0
    %471 = vmatpush1.xpose.msra.mxu0 %v151
    %472 = vmatprep.subr.mxu0 0.0
    %473 = vmatpush1.xpose.msra.mxu0 %v156
    %474 = vmatprep.subr.mxu0 0.0
    %475 = vmatpush1.xpose.msra.mxu0 %v161
    %476 = vmatprep.subr.mxu0 0.0
    %477 = vmatpush1.xpose.msra.mxu0 %v166
    %478 = vmatprep.subr.mxu0 0.0
    %479 = vmatpush1.xpose.msra.mxu0 %v171
    %480 = vmatprep.subr.mxu0 0.0
    %481 = vmatpush1.xpose.msra.mxu0 %v176
    %482 = vmatprep.subr.mxu0 0.0
    %483 = vmatpush1.xpose.msra.mxu0 %v181
    %484 = vmatprep.subr.mxu0 0.0
    %485 = vmatpush1.xpose.msra.mxu0 %v186
    %486 = vmatprep.subr.mxu0 0.0
    %487 = vmatpush1.xpose.msra.mxu0 %v191
    %488 = vmatprep.subr.mxu0 0.0
    %489 = vmatpush1.xpose.msra.mxu0 %v196
    %490 = vmatprep.subr.mxu0 0.0
    %491 = vmatpush1.xpose.msra.mxu0 %v201
    %492 = vmatprep.subr.mxu0 0.0
    %493 = vmatpush1.xpose.msra.mxu0 %v206
    %494 = vmatprep.subr.mxu0 0.0
    %495 = vmatpush1.xpose.msra.mxu0 %v211
    %496 = vmatprep.subr.mxu0 0.0
    %497 = vmatpush1.xpose.msra.mxu0 %v216
    %498 = vmatprep.subr.mxu0 0.0
    %499 = vmatpush1.xpose.msra.mxu0 %v221
    %500 = vmatprep.subr.mxu0 0.0
    %501 = vmatpush1.xpose.msra.mxu0 %v226
    %502 = vmatprep.subr.mxu0 0.0
    %503 = vmatpush1.xpose.msra.mxu0 %v231
    %504 = vmatprep.subr.mxu0 0.0
    %505 = vmatpush1.xpose.msra.mxu0 %v236
    %506 = vmatprep.subr.mxu0 0.0
    %507 = vmatpush1.xpose.msra.mxu0 %v241
    %508 = vmatprep.subr.mxu0 0.0
    %509 = vmatpush1.xpose.msra.mxu0 %v246
    %510 = vmatprep.subr.mxu0 0.0
    %511 = vmatpush1.xpose.msra.mxu0 %v251
    %512 = vmatprep.subr.mxu0 0.0
    %513 = vmatpush1.xpose.msra.mxu0 %v256
    %514 = vmatprep.subr.mxu0 0.0
    %515 = vmatpush1.xpose.msra.mxu0 %v261
    %516 = vmatprep.subr.mxu0 0.0
    %517 = vmatpush1.xpose.msra.mxu0 %v266
    %518 = vmatprep.subr.mxu0 0.0
    %519 = vmatpush1.xpose.msra.mxu0 %v271
    %520 = vmatprep.subr.mxu0 0.0
    %521 = vmatpush1.xpose.msra.mxu0 %v276
    %522 = vmatprep.subr.mxu0 0.0
    %523 = vmatpush1.xpose.msra.mxu0 %v281
    %524 = vmatprep.subr.mxu0 0.0
    %525 = vmatpush1.xpose.msra.mxu0 %v286
    %526 = vmatprep.subr.mxu0 0.0
    %527 = vmatpush1.xpose.msra.mxu0 %v291
    %528 = vmatprep.subr.mxu0 0.0
    %529 = vmatpush1.xpose.msra.mxu0 %v296
    %530 = vmatprep.subr.mxu0 0.0
    %531 = vmatpush1.xpose.msra.mxu0 %v301
    %532 = vmatprep.subr.mxu0 0.0
    %533 = vmatpush1.xpose.msra.mxu0 %v306
    %534 = vmatprep.mubr.f32.mxu0 0.0
    %535 = vmatmul.mubr.f32.gmra.mrb[0].mxu0 %v469
    %v536 = vpop.f32.mrb[0].mxu0
    %v537 = vadd.f32 0.0, %v536
    %v538 = vpop.f32.mrb[0].mxu0
    %v539 = vadd.f32 0.0, %v538
    %540 = vdwg.mxu0
    %v543 = vcombine.low %v537, %v539
    %v545 = vunpack.c.l.s4 1966171168
    %v546 = vunpack.c.0.s8 %v545
    %v547 = vlaneseq
    %v548 = vshrl.u32 %v547, 7
    %v549 = vsub.s32 %v546, %v548
    %v550 = vrot.slane %v543, %v549
    %v552 = vunpack.c.l.s4 1966171168
    %v553 = vunpack.c.0.s8 %v552
    %v554 = vlaneseq
    %v555 = vshrl.u32 %v554, 7
    %v556 = vsub.s32 %v553, %v555
    %v557 = vrot.slane %v550, %v556
    %v559 = vlaneseq
    %vm560 = vcmp.ge.s32.totalorder %v559, 0
    %vm561 = vcmp.lt.s32.totalorder %v559, 256
    %vm562 = vmand %vm560, %vm561
    %563 = vst.msk [vmem:[#allocation6] sm:$0x3] %vm562, %v557
    %v564 = vld [vmem:[%s3] sm:$0xff]
    %v565 = vld [vmem:[%s3 + $0x8] sm:$0xff]
    %v566 = vld [vmem:[%s3 + $0x10] sm:$0xff]
    %v567 = vld [vmem:[%s3 + $0x18] sm:$0xff]
    %v568 = vld [vmem:[%s3 + $0x20] sm:$0xff]
    %v569 = vld [vmem:[%s3 + $0x28] sm:$0xff]
    %v570 = vld [vmem:[%s3 + $0x30] sm:$0xff]
    %v571 = vld [vmem:[%s3 + $0x38] sm:$0xff]
    %v572 = vld [vmem:[%s3 + $0x40] sm:$0xff]
    %v573 = vld [vmem:[%s3 + $0x48] sm:$0xff]
    %v574 = vld [vmem:[%s3 + $0x50] sm:$0xff]
    %v575 = vld [vmem:[%s3 + $0x58] sm:$0xff]
    %v576 = vld [vmem:[%s3 + $0x60] sm:$0xff]
    %v577 = vld [vmem:[%s3 + $0x68] sm:$0xff]
    %v578 = vld [vmem:[%s3 + $0x70] sm:$0xff]
    %v579 = vld [vmem:[%s3 + $0x78] sm:$0xff]
    %580 = vmatprep.subr.mxu0 0.0
    %581 = vmatpush1.msra.mxu0 %v564
    %582 = vmatprep.subr.mxu0 0.0
    %583 = vmatpush1.msra.mxu0 %v565
    %584 = vmatprep.subr.mxu0 0.0
    %585 = vmatpush1.msra.mxu0 %v566
    %586 = vmatprep.subr.mxu0 0.0
    %587 = vmatpush1.msra.mxu0 %v567
    %588 = vmatprep.subr.mxu0 0.0
    %589 = vmatpush1.msra.mxu0 %v568
    %590 = vmatprep.subr.mxu0 0.0
    %591 = vmatpush1.msra.mxu0 %v569
    %592 = vmatprep.subr.mxu0 0.0
    %593 = vmatpush1.msra.mxu0 %v570
    %594 = vmatprep.subr.mxu0 0.0
    %595 = vmatpush1.msra.mxu0 %v571
    %596 = vmatprep.subr.mxu0 0.0
    %597 = vmatpush1.msra.mxu0 %v572
    %598 = vmatprep.subr.mxu0 0.0
    %599 = vmatpush1.msra.mxu0 %v573
    %600 = vmatprep.subr.mxu0 0.0
    %601 = vmatpush1.msra.mxu0 %v574
    %602 = vmatprep.subr.mxu0 0.0
    %603 = vmatpush1.msra.mxu0 %v575
    %604 = vmatprep.subr.mxu0 0.0
    %605 = vmatpush1.msra.mxu0 %v576
    %606 = vmatprep.subr.mxu0 0.0
    %607 = vmatpush1.msra.mxu0 %v577
    %608 = vmatprep.subr.mxu0 0.0
    %609 = vmatpush1.msra.mxu0 %v578
    %610 = vmatprep.subr.mxu0 0.0
    %611 = vmatpush1.msra.mxu0 %v579
    %612 = vmatprep.subr.mxu0 0.0
    %613 = vmatpush1.msra.mxu0 0.0
    %614 = vmatprep.subr.mxu0 0.0
    %615 = vmatpush1.msra.mxu0 0.0
    %616 = vmatprep.subr.mxu0 0.0
    %617 = vmatpush1.msra.mxu0 0.0
    %618 = vmatprep.subr.mxu0 0.0
    %619 = vmatpush1.msra.mxu0 0.0
    %620 = vmatprep.subr.mxu0 0.0
    %621 = vmatpush1.msra.mxu0 0.0
    %622 = vmatprep.subr.mxu0 0.0
    %623 = vmatpush1.msra.mxu0 0.0
    %624 = vmatprep.subr.mxu0 0.0
    %625 = vmatpush1.msra.mxu0 0.0
    %626 = vmatprep.subr.mxu0 0.0
    %627 = vmatpush1.msra.mxu0 0.0
    %628 = vmatprep.subr.mxu0 0.0
    %629 = vmatpush1.msra.mxu0 0.0
    %630 = vmatprep.subr.mxu0 0.0
    %631 = vmatpush1.msra.mxu0 0.0
    %632 = vmatprep.subr.mxu0 0.0
    %633 = vmatpush1.msra.mxu0 0.0
    %634 = vmatprep.subr.mxu0 0.0
    %635 = vmatpush1.msra.mxu0 0.0
    %636 = vmatprep.subr.mxu0 0.0
    %637 = vmatpush1.msra.mxu0 0.0
    %638 = vmatprep.subr.mxu0 0.0
    %639 = vmatpush1.msra.mxu0 0.0
    %640 = vmatprep.subr.mxu0 0.0
    %641 = vmatpush1.msra.mxu0 0.0
    %642 = vmatprep.subr.mxu0 0.0
    %643 = vmatpush1.msra.mxu0 0.0
    %644 = vmatprep.mubr.f32.mxu0 0.0
    %645 = vmatmul.mubr.f32.gmra.mrb[0].mxu0 %v151
    %v646 = vpop.f32.mrb[0].mxu0
    %v647 = vadd.f32 0.0, %v646
    %v648 = vpop.f32.mrb[0].mxu0
    %649 = vmatprep.mubr.f32.mxu0 0.0
    %650 = vmatmul.mubr.f32.gmra.mrb[0].mxu0 %v156
    %v651 = vpop.f32.mrb[0].mxu0
    %v652 = vadd.f32 0.0, %v651
    %v653 = vpop.f32.mrb[0].mxu0
    %654 = vmatprep.mubr.f32.mxu0 0.0
    %655 = vmatmul.mubr.f32.gmra.mrb[0].mxu0 %v161
    %v656 = vpop.f32.mrb[0].mxu0
    %v657 = vadd.f32 0.0, %v656
    %v658 = vpop.f32.mrb[0].mxu0
    %659 = vmatprep.mubr.f32.mxu0 0.0
    %660 = vmatmul.mubr.f32.gmra.mrb[0].mxu0 %v166
    %v661 = vpop.f32.mrb[0].mxu0
    %v662 = vadd.f32 0.0, %v661
    %v663 = vpop.f32.mrb[0].mxu0
    %664 = vmatprep.mubr.f32.mxu0 0.0
    %665 = vmatmul.mubr.f32.gmra.mrb[0].mxu0 %v171
    %v666 = vpop.f32.mrb[0].mxu0
    %v667 = vadd.f32 0.0, %v666
    %v668 = vpop.f32.mrb[0].mxu0
    %669 = vmatprep.mubr.f32.mxu0 0.0
    %670 = vmatmul.mubr.f32.gmra.mrb[0].mxu0 %v176
    %v671 = vpop.f32.mrb[0].mxu0
    %v672 = vadd.f32 0.0, %v671
    %v673 = vpop.f32.mrb[0].mxu0
    %674 = vmatprep.mubr.f32.mxu0 0.0
    %675 = vmatmul.mubr.f32.gmra.mrb[0].mxu0 %v181
    %v676 = vpop.f32.mrb[0].mxu0
    %v677 = vadd.f32 0.0, %v676
    %v678 = vpop.f32.mrb[0].mxu0
    %679 = vmatprep.mubr.f32.mxu0 0.0
    %680 = vmatmul.mubr.f32.gmra.mrb[0].mxu0 %v186
    %v681 = vpop.f32.mrb[0].mxu0
    %v682 = vadd.f32 0.0, %v681
    %v683 = vpop.f32.mrb[0].mxu0
    %684 = vmatprep.mubr.f32.mxu0 0.0
    %685 = vmatmul.mubr.f32.gmra.mrb[0].mxu0 %v191
    %v686 = vpop.f32.mrb[0].mxu0
    %v687 = vadd.f32 0.0, %v686
    %v688 = vpop.f32.mrb[0].mxu0
    %689 = vmatprep.mubr.f32.mxu0 0.0
    %690 = vmatmul.mubr.f32.gmra.mrb[0].mxu0 %v196
    %v691 = vpop.f32.mrb[0].mxu0
    %v692 = vadd.f32 0.0, %v691
    %v693 = vpop.f32.mrb[0].mxu0
    %694 = vmatprep.mubr.f32.mxu0 0.0
    %695 = vmatmul.mubr.f32.gmra.mrb[0].mxu0 %v201
    %v696 = vpop.f32.mrb[0].mxu0
    %v697 = vadd.f32 0.0, %v696
    %v698 = vpop.f32.mrb[0].mxu0
    %699 = vmatprep.mubr.f32.mxu0 0.0
    %700 = vmatmul.mubr.f32.gmra.mrb[0].mxu0 %v206
    %v701 = vpop.f32.mrb[0].mxu0
    %v702 = vadd.f32 0.0, %v701
    %v703 = vpop.f32.mrb[0].mxu0
    %704 = vmatprep.mubr.f32.mxu0 0.0
    %705 = vmatmul.mubr.f32.gmra.mrb[0].mxu0 %v211
    %v706 = vpop.f32.mrb[0].mxu0
    %v707 = vadd.f32 0.0, %v706
    %v708 = vpop.f32.mrb[0].mxu0
    %709 = vmatprep.mubr.f32.mxu0 0.0
    %710 = vmatmul.mubr.f32.gmra.mrb[0].mxu0 %v216
    %v711 = vpop.f32.mrb[0].mxu0
    %v712 = vadd.f32 0.0, %v711
    %v713 = vpop.f32.mrb[0].mxu0
    %714 = vmatprep.mubr.f32.mxu0 0.0
    %715 = vmatmul.mubr.f32.gmra.mrb[0].mxu0 %v221
    %v716 = vpop.f32.mrb[0].mxu0
    %v717 = vadd.f32 0.0, %v716
    %v718 = vpop.f32.mrb[0].mxu0
    %719 = vmatprep.mubr.f32.mxu0 0.0
    %720 = vmatmul.mubr.f32.gmra.mrb[0].mxu0 %v226
    %v721 = vpop.f32.mrb[0].mxu0
    %v722 = vadd.f32 0.0, %v721
    %v723 = vpop.f32.mrb[0].mxu0
    %724 = vmatprep.mubr.f32.mxu0 0.0
    %725 = vmatmul.mubr.f32.gmra.mrb[0].mxu0 %v231
    %v726 = vpop.f32.mrb[0].mxu0
    %v727 = vadd.f32 0.0, %v726
    %v728 = vpop.f32.mrb[0].mxu0
    %729 = vmatprep.mubr.f32.mxu0 0.0
    %730 = vmatmul.mubr.f32.gmra.mrb[0].mxu0 %v236
    %v731 = vpop.f32.mrb[0].mxu0
    %v732 = vadd.f32 0.0, %v731
    %v733 = vpop.f32.mrb[0].mxu0
    %734 = vmatprep.mubr.f32.mxu0 0.0
    %735 = vmatmul.mubr.f32.gmra.mrb[0].mxu0 %v241
    %v736 = vpop.f32.mrb[0].mxu0
    %v737 = vadd.f32 0.0, %v736
    %v738 = vpop.f32.mrb[0].mxu0
    %739 = vmatprep.mubr.f32.mxu0 0.0
    %740 = vmatmul.mubr.f32.gmra.mrb[0].mxu0 %v246
    %v741 = vpop.f32.mrb[0].mxu0
    %v742 = vadd.f32 0.0, %v741
    %v743 = vpop.f32.mrb[0].mxu0
    %744 = vmatprep.mubr.f32.mxu0 0.0
    %745 = vmatmul.mubr.f32.gmra.mrb[0].mxu0 %v251
    %v746 = vpop.f32.mrb[0].mxu0
    %v747 = vadd.f32 0.0, %v746
    %v748 = vpop.f32.mrb[0].mxu0
    %749 = vmatprep.mubr.f32.mxu0 0.0
    %750 = vmatmul.mubr.f32.gmra.mrb[0].mxu0 %v256
    %v751 = vpop.f32.mrb[0].mxu0
    %v752 = vadd.f32 0.0, %v751
    %v753 = vpop.f32.mrb[0].mxu0
    %754 = vmatprep.mubr.f32.mxu0 0.0
    %755 = vmatmul.mubr.f32.gmra.mrb[0].mxu0 %v261
    %v756 = vpop.f32.mrb[0].mxu0
    %v757 = vadd.f32 0.0, %v756
    %v758 = vpop.f32.mrb[0].mxu0
    %759 = vmatprep.mubr.f32.mxu0 0.0
    %760 = vmatmul.mubr.f32.gmra.mrb[0].mxu0 %v266
    %v761 = vpop.f32.mrb[0].mxu0
    %v762 = vadd.f32 0.0, %v761
    %v763 = vpop.f32.mrb[0].mxu0
    %764 = vmatprep.mubr.f32.mxu0 0.0
    %765 = vmatmul.mubr.f32.gmra.mrb[0].mxu0 %v271
    %v766 = vpop.f32.mrb[0].mxu0
    %v767 = vadd.f32 0.0, %v766
    %v768 = vpop.f32.mrb[0].mxu0
    %769 = vmatprep.mubr.f32.mxu0 0.0
    %770 = vmatmul.mubr.f32.gmra.mrb[0].mxu0 %v276
    %v771 = vpop.f32.mrb[0].mxu0
    %v772 = vadd.f32 0.0, %v771
    %v773 = vpop.f32.mrb[0].mxu0
    %774 = vmatprep.mubr.f32.mxu0 0.0
    %775 = vmatmul.mubr.f32.gmra.mrb[0].mxu0 %v281
    %v776 = vpop.f32.mrb[0].mxu0
    %v777 = vadd.f32 0.0, %v776
    %v778 = vpop.f32.mrb[0].mxu0
    %779 = vmatprep.mubr.f32.mxu0 0.0
    %780 = vmatmul.mubr.f32.gmra.mrb[0].mxu0 %v286
    %v781 = vpop.f32.mrb[0].mxu0
    %v782 = vadd.f32 0.0, %v781
    %v783 = vpop.f32.mrb[0].mxu0
    %784 = vmatprep.mubr.f32.mxu0 0.0
    %785 = vmatmul.mubr.f32.gmra.mrb[0].mxu0 %v291
    %v786 = vpop.f32.mrb[0].mxu0
    %v787 = vadd.f32 0.0, %v786
    %v788 = vpop.f32.mrb[0].mxu0
    %789 = vmatprep.mubr.f32.mxu0 0.0
    %790 = vmatmul.mubr.f32.gmra.mrb[0].mxu0 %v296
    %v791 = vpop.f32.mrb[0].mxu0
    %v792 = vadd.f32 0.0, %v791
    %v793 = vpop.f32.mrb[0].mxu0
    %794 = vmatprep.mubr.f32.mxu0 0.0
    %795 = vmatmul.mubr.f32.gmra.mrb[0].mxu0 %v301
    %v796 = vpop.f32.mrb[0].mxu0
    %v797 = vadd.f32 0.0, %v796
    %v798 = vpop.f32.mrb[0].mxu0
    %799 = vmatprep.mubr.f32.mxu0 0.0
    %800 = vmatmul.mubr.f32.gmra.mrb[0].mxu0 %v306
    %v801 = vpop.f32.mrb[0].mxu0
    %v802 = vadd.f32 0.0, %v801
    %v803 = vpop.f32.mrb[0].mxu0
    %804 = vdwg.mxu0
    %vm805 = vcmask 7168
    %806 = vst.msk [vmem:[%s6] sm:$0xff] %vm805, %v647
    %807 = vst.msk [vmem:[%s6 + $0x8] sm:$0xff] %vm805, %v652
    %808 = vst.msk [vmem:[%s6 + $0x10] sm:$0xff] %vm805, %v657
    %809 = vst.msk [vmem:[%s6 + $0x18] sm:$0xff] %vm805, %v662
    %810 = vst.msk [vmem:[%s6 + $0x20] sm:$0xff] %vm805, %v667
    %811 = vst.msk [vmem:[%s6 + $0x28] sm:$0xff] %vm805, %v672
    %812 = vst.msk [vmem:[%s6 + $0x30] sm:$0xff] %vm805, %v677
    %813 = vst.msk [vmem:[%s6 + $0x38] sm:$0xff] %vm805, %v682
    %814 = vst.msk [vmem:[%s6 + $0x40] sm:$0xff] %vm805, %v687
    %815 = vst.msk [vmem:[%s6 + $0x48] sm:$0xff] %vm805, %v692
    %816 = vst.msk [vmem:[%s6 + $0x50] sm:$0xff] %vm805, %v697
    %817 = vst.msk [vmem:[%s6 + $0x58] sm:$0xff] %vm805, %v702
    %818 = vst.msk [vmem:[%s6 + $0x60] sm:$0xff] %vm805, %v707
    %819 = vst.msk [vmem:[%s6 + $0x68] sm:$0xff] %vm805, %v712
    %820 = vst.msk [vmem:[%s6 + $0x70] sm:$0xff] %vm805, %v717
    %821 = vst.msk [vmem:[%s6 + $0x78] sm:$0xff] %vm805, %v722
    %822 = vst.msk [vmem:[%s6 + $0x80] sm:$0xff] %vm805, %v727
    %823 = vst.msk [vmem:[%s6 + $0x88] sm:$0xff] %vm805, %v732
    %824 = vst.msk [vmem:[%s6 + $0x90] sm:$0xff] %vm805, %v737
    %825 = vst.msk [vmem:[%s6 + $0x98] sm:$0xff] %vm805, %v742
    %826 = vst.msk [vmem:[%s6 + $0xa0] sm:$0xff] %vm805, %v747
    %827 = vst.msk [vmem:[%s6 + $0xa8] sm:$0xff] %vm805, %v752
    %828 = vst.msk [vmem:[%s6 + $0xb0] sm:$0xff] %vm805, %v757
    %829 = vst.msk [vmem:[%s6 + $0xb8] sm:$0xff] %vm805, %v762
    %830 = vst.msk [vmem:[%s6 + $0xc0] sm:$0xff] %vm805, %v767
    %831 = vst.msk [vmem:[%s6 + $0xc8] sm:$0xff] %vm805, %v772
    %832 = vst.msk [vmem:[%s6 + $0xd0] sm:$0xff] %vm805, %v777
    %833 = vst.msk [vmem:[%s6 + $0xd8] sm:$0xff] %vm805, %v782
    %834 = vst.msk [vmem:[%s6 + $0xe0] sm:$0xff] %vm805, %v787
    %835 = vst.msk [vmem:[%s6 + $0xe8] sm:$0xff] %vm805, %v792
    %836 = vst.msk [vmem:[%s6 + $0xf0] sm:$0xff] %vm805, %v797
    %837 = vst.msk [vmem:[%s6 + $0xf8] sm:$0xff] %vm805, %v802
    // Predicated region
    $region22: #{tpu_custom_call.1} parent=1 // pred_check
      _
    $region23: #{tpu_custom_call.1} parent=1 // pred_check_branch
      %839 = sbr.rel (0) target = $region25
    $region24: #{tpu_custom_call.1} parent=1 // pred_region
      %s841 = ssub.s32 2048, 2048
      %842 = vsyncadd [#allocation4], %s841
      %s843 = sshll.u32 [#allocation5], 4
      %s844 = int_to_ptr.vmem [resolvable:$true] %s843
      %849 = dma.vmem_to_hbm [thread:$0]  %s844, 2048, %s4, [#allocation4], 64, 64, 4
    $region25: #{tpu_custom_call.1} parent=1 // pred_fallthru
      _
    // Predicated region
    $region26: #{tpu_custom_call.1} parent=1 // pred_check
      _
    $region27: #{tpu_custom_call.1} parent=1 // pred_check_branch
      %851 = sbr.rel (0) target = $region29
    $region28: #{tpu_custom_call.1} parent=1 // pred_region
      %s853 = ssub.s32 32, 32
      %854 = vsyncadd [#allocation7], %s853
      %s856 = sshll.u32 [#allocation6], 4
      %s857 = int_to_ptr.vmem [resolvable:$true] %s856
      %859 = dma.vmem_to_hbm [thread:$0]  %s857, 32, %s5, [#allocation7]
    $region29: #{tpu_custom_call.1} parent=1 // pred_fallthru
      _
    // Predicated region
    $region30: #{tpu_custom_call.1} parent=1 // pred_check
      _
    $region31: #{tpu_custom_call.1} parent=1 // pred_check_branch
      %861 = sbr.rel (0) target = $region33
    $region32: #{tpu_custom_call.1} parent=1 // pred_region
      _
    $region33: #{tpu_custom_call.1} parent=1 // pred_fallthru
      _
    // Predicated region
    $region34: #{tpu_custom_call.1} parent=1 // pred_check
      _
    $region35: #{tpu_custom_call.1} parent=1 // pred_check_branch
      %863 = sbr.rel (0) target = $region37
    $region36: #{tpu_custom_call.1} parent=1 // pred_region
      %864 = dma.done [#allocation4], 2048
    $region37: #{tpu_custom_call.1} parent=1 // pred_fallthru
      _
    // Predicated region
    $region38: #{tpu_custom_call.1} parent=1 // pred_check
      _
    $region39: #{tpu_custom_call.1} parent=1 // pred_check_branch
      %866 = sbr.rel (0) target = $region41
    $region40: #{tpu_custom_call.1} parent=1 // pred_region
      %867 = dma.done [#allocation7], 32
    $region41: #{tpu_custom_call.1} parent=1 // pred_fallthru
      _
    // Predicated region
    $region42: #{tpu_custom_call.1} parent=1 // pred_check
      _
    $region43: #{tpu_custom_call.1} parent=1 // pred_check_branch
      %869 = sbr.rel (0) target = $region45
    $region44: #{tpu_custom_call.1} parent=1 // pred_region
      _
    $region45: #{tpu_custom_call.1} parent=1 // pred_fallthru
      _
    %870 = vsyncpa [#allocation3], 1
    %871 = vsyncpa [#allocation4], 1
    %872 = vsyncpa [#allocation7], 1

</llo_original>
